<compile_context>
chip_gen: v7x
topology: tpu7x:2x2x1
jax: 0.10.0
libtpu: 0.0.40
codegen_flags: <defaults>
</compile_context>

<pallas_src>
import jax
import jax.numpy as jnp
from jax.experimental import pallas as pl
from jax.experimental.pallas import tpu as pltpu

_LANES = 128
_SUBLANES = 8
_ALIGN = _LANES * _SUBLANES      # 1024 elements = one full (8,128) f32 vreg tile
_MIN_SPLIT_ROWS = 1024           # only split a single resident block across TCs
                                 # if each half gets >= 1024 rows (~128K elems)


def _ddsigmoid_out_kernel(x_ref, o_ref):
    # Elementwise: 1 EUP sigmoid + a handful of VPU mul/sub per element.
    x = x_ref[...]
    s = jax.nn.sigmoid(0.1 * x)
    o_ref[...] = (0.01 * s * (1.0 - s) * (1.0 - 2.0 * s)).astype(o_ref.dtype)


def ddsigmoid_out(x: jax.Array, *, block_rows: int = 4096) -> jax.Array:
    """Pallas equivalent of DDSigmoid_out.forward for any-shaped input."""
    orig_shape = x.shape
    dtype = x.dtype
    n = x.size
    if n == 0:
        return jnp.reshape(x, orig_shape)

    # --- Flatten to a lane-dense 2D slab (rows, 128) -------------------------
    aligned = (n % _ALIGN) == 0
    x_flat = jnp.ravel(x)
    if aligned:
        rows = n // _LANES
        x2d = x_flat.reshape(rows, _LANES)
    else:
        # Pad only the ragged tail up to (8,128) granularity (< 1024 elements),
        # never up to a multiple of block_rows.
        rows = pl.cdiv(n, _ALIGN) * _SUBLANES
        pad = rows * _LANES - n
        x2d = jnp.pad(x_flat, (0, pad)).reshape(rows, _LANES)

    # --- Block size / grid ----------------------------------------------------
    br = min(block_rows, rows)  # rows and block_rows are both multiples of 8
    if br == rows and rows >= 2 * _MIN_SPLIT_ROWS:
        # Everything fits in one block but there is enough work to be worth
        # splitting into two grid steps so the "parallel" axis can shard across
        # the 2 TensorCores on v7x (no-op on single-TC v5e/v6e).
        br = pl.cdiv(pl.cdiv(rows, 2), _SUBLANES) * _SUBLANES
    grid = (pl.cdiv(rows, br),)  # ragged last block handled by Pallas masking

    itemsize = jnp.dtype(dtype).itemsize
    cost = pl.CostEstimate(
        flops=6 * n,
        transcendentals=n,
        bytes_accessed=2 * n * itemsize,
    )

    out2d = pl.pallas_call(
        _ddsigmoid_out_kernel,
        out_shape=jax.ShapeDtypeStruct((rows, _LANES), dtype),
        grid_spec=pltpu.PrefetchScalarGridSpec(
            num_scalar_prefetch=0,
            grid=grid,
            in_specs=[pl.BlockSpec((br, _LANES), lambda i: (i, 0))],
            out_specs=pl.BlockSpec((br, _LANES), lambda i: (i, 0)),
        ),
        compiler_params=pltpu.CompilerParams(
            dimension_semantics=("parallel",),
        ),
        cost_estimate=cost,
    )(x2d)

    if aligned:
        return out2d.reshape(orig_shape)
    return out2d.reshape(-1)[:n].reshape(orig_shape)


def _reference(x):
    s = jax.nn.sigmoid(0.1 * x)
    return 0.01 * s * (1.0 - s) * (1.0 - 2.0 * s)


if __name__ == "__main__":
    key = jax.random.PRNGKey(0)

    # NCHW-style input, consistent with the PyTorch module's typical usage.
    x = jax.random.normal(key, (2, 4, 16, 16), dtype=jnp.float32)
    y = ddsigmoid_out(x)
    jax.block_until_ready(y)
    assert y.shape == x.shape and y.dtype == x.dtype
    assert jnp.allclose(y, _reference(x), atol=1e-6, rtol=1e-5)

    # Exercise the ragged (non-1024-aligned) tail path as well.
    x2 = jax.random.normal(jax.random.PRNGKey(1), (3, 5, 7), dtype=jnp.float32)
    y2 = ddsigmoid_out(x2)
    jax.block_until_ready(y2)
    assert y2.shape == x2.shape and y2.dtype == x2.dtype
    assert jnp.allclose(y2, _reference(x2), atol=1e-6, rtol=1e-5)

    print("KERNEL_OK")
</pallas_src>

<mosaic_0001>
module attributes {stable_mosaic.version = 11 : i64} {
  func.func @_ddsigmoid_out_kernel(%arg0: i32, %arg1: memref<16x128xf32, #tpu.memory_space<vmem>>, %arg2: memref<16x128xf32, #tpu.memory_space<vmem>>) attributes {dimension_semantics = [#tpu.dimension_semantics<parallel>], iteration_bounds = array<i64: 1>, scalar_prefetch = 0 : i64, scratch_operands = 0 : i64, tpu.core_type = #tpu.core_type<tc>, window_params = [{transform_indices = @transform_0, window_bounds = array<i64: 16, 128>}, {transform_indices = @transform_1, window_bounds = array<i64: 16, 128>}]} {
    %c0 = arith.constant 0 : index
    %c0_0 = arith.constant 0 : index
    %0 = vector.load %arg1[%c0, %c0_0] : memref<16x128xf32, #tpu.memory_space<vmem>>, vector<16x128xf32>
    %cst = arith.constant 1.000000e-01 : f32
    %1 = vector.broadcast %cst : f32 to vector<16x128xf32>
    %2 = arith.mulf %1, %0 : vector<16x128xf32>
    %3 = arith.negf %2 : vector<16x128xf32>
    %4 = math.exp %3 : vector<16x128xf32>
    %cst_1 = arith.constant 1.000000e+00 : f32
    %5 = vector.broadcast %cst_1 : f32 to vector<16x128xf32>
    %6 = arith.addf %5, %4 : vector<16x128xf32>
    %7 = arith.divf %5, %6 : vector<16x128xf32>
    %cst_2 = arith.constant 0.00999999977 : f32
    %8 = vector.broadcast %cst_2 : f32 to vector<16x128xf32>
    %9 = arith.mulf %8, %7 : vector<16x128xf32>
    %cst_3 = arith.constant 1.000000e+00 : f32
    %10 = vector.broadcast %cst_3 : f32 to vector<16x128xf32>
    %11 = arith.subf %10, %7 : vector<16x128xf32>
    %12 = arith.mulf %9, %11 : vector<16x128xf32>
    %cst_4 = arith.constant 2.000000e+00 : f32
    %13 = vector.broadcast %cst_4 : f32 to vector<16x128xf32>
    %14 = arith.mulf %13, %7 : vector<16x128xf32>
    %cst_5 = arith.constant 1.000000e+00 : f32
    %15 = vector.broadcast %cst_5 : f32 to vector<16x128xf32>
    %16 = arith.subf %15, %14 : vector<16x128xf32>
    %17 = arith.mulf %12, %16 : vector<16x128xf32>
    %c0_6 = arith.constant 0 : index
    %c0_7 = arith.constant 0 : index
    %18 = vector.load %arg2[%c0_6, %c0_7] : memref<16x128xf32, #tpu.memory_space<vmem>>, vector<16x128xf32>
    tpu.vector_store %arg2[%c0_6, %c0_7], %17 {strides = array<i32>} : memref<16x128xf32, #tpu.memory_space<vmem>>, vector<16x128xf32>,
    return
  }
  func.func @transform_0(%arg0: i32) -> (i32, i32) {
    %c0_i32 = arith.constant 0 : i32
    %c0_i32_0 = arith.constant 0 : i32
    return %arg0, %c0_i32 : i32, i32
  }
  func.func @transform_1(%arg0: i32) -> (i32, i32) {
    %c0_i32 = arith.constant 0 : i32
    %c0_i32_0 = arith.constant 0 : i32
    return %arg0, %c0_i32 : i32, i32
  }
}

</mosaic_0001>

<llo_original>
// kernel: tpu_custom_call.1
$region0: #{tpu_custom_call.1}
  #allocation0 [shape = 'u32[]', space=smem, size = 0x4, offset = 0x4, fixed_abs, tag = 'smem constant byte address 0x4 - core index']
  #allocation1 [shape = 'u32[144,128]{1,0:T(1,128)}', space=vmem, size = 0x12000, scoped, tag = 'internal scratch']
  %s0 = inlined_call_operand.hbm [shape: f32[16,128], index: 0, kind: input, shape index: {}]
  %s1 = inlined_call_operand.hbm [shape: f32[16,128], index: 1, kind: output, shape index: {}]
  %s2 = sld [smem:[#allocation0]]
  $region18: #{tpu_custom_call.1} parent=0
    _
  %s4 = ssub.s32 1, %s2
  %s5 = scalar_select 0, %s4, %s2
  $region1: #{tpu_custom_call.1} parent=0
    #allocation2 [shape = 'u8[8192]{0}', space=vmem, size = 0x2000, scoped, tag = 'input window, operand 0, single buffered']
    #allocation3 [shape = 's32[1]{0}', space=sflag, size = 0x4, scoped, tag = 'scoped memory for tpu_custom_call.1']
    #allocation4 [shape = 's32[1]{0}', space=sflag, size = 0x4, scoped, tag = 'scoped memory for tpu_custom_call.1']
    #allocation5 [shape = 'u8[8192]{0}', space=vmem, size = 0x2000, scoped, tag = 'output window, operand 0, single buffered']
    %6 = vsyncpa [#allocation3], 0
    %7 = vsyncpa [#allocation4], 0
    // Predicated region
    $region2: #{tpu_custom_call.1} parent=1 // pred_check
      _
    $region3: #{tpu_custom_call.1} parent=1 // pred_check_branch
      %9 = sbr.rel (0) target = $region5
    $region4: #{tpu_custom_call.1} parent=1 // pred_region
      %s11 = ssub.s32 256, 256
      %12 = vsyncadd [#allocation3], %s11
      %s13 = sshll.u32 [#allocation2], 4
      %s14 = int_to_ptr.vmem [resolvable:$true] %s13
      %19 = dma.hbm_to_vmem [thread:$0]  %s0, 256, %s14, [#allocation3], 128, 128, 8
    $region5: #{tpu_custom_call.1} parent=1 // pred_fallthru
      _
    // Predicated region
    $region6: #{tpu_custom_call.1} parent=1 // pred_check
      _
    $region7: #{tpu_custom_call.1} parent=1 // pred_check_branch
      %21 = sbr.rel (0) target = $region9
    $region8: #{tpu_custom_call.1} parent=1 // pred_region
      %22 = dma.done [#allocation3], 256
    $region9: #{tpu_custom_call.1} parent=1 // pred_fallthru
      _
    %v23 = vld [vmem:[#allocation2] sm:$0xff]
    %v24 = vld [vmem:[#allocation2 + $0x8] sm:$0xff]
    %v25 = vmul.f32 %v23, 0.1
    %v26 = vmul.f32 %v24, 0.1
    %v27 = vxor.u32 %v25, 2147483648
    %v28 = vxor.u32 %v26, 2147483648
    %v29 = vmul.f32 %v27, 1.442695
    %v30 = vpow.pop %v29
    %v31 = vmul.f32 %v28, 1.442695
    %v32 = vpow.pop %v31
    %v33 = vadd.f32 %v30, 1.0
    %v34 = vadd.f32 %v32, 1.0
    %v35 = vrcp.pop %v33
    %v36 = vmul.f32 1.0, %v35
    %v37 = vrcp.pop %v34
    %v38 = vmul.f32 1.0, %v37
    %v39 = vmul.f32 %v36, 0.01
    %v40 = vmul.f32 %v38, 0.01
    %v41 = vsub.f32 1.0, %v36
    %v42 = vsub.f32 1.0, %v38
    %v43 = vmul.f32 %v39, %v41
    %v44 = vmul.f32 %v40, %v42
    %v45 = vmul.f32 %v36, 2.0
    %v46 = vmul.f32 %v38, 2.0
    %v47 = vsub.f32 1.0, %v45
    %v48 = vsub.f32 1.0, %v46
    %v49 = vmul.f32 %v43, %v47
    %v50 = vmul.f32 %v44, %v48
    %51 = vst [vmem:[#allocation5] sm:$0xff] %v49
    %52 = vst [vmem:[#allocation5 + $0x8] sm:$0xff] %v50
    // Predicated region
    $region10: #{tpu_custom_call.1} parent=1 // pred_check
      _
    $region11: #{tpu_custom_call.1} parent=1 // pred_check_branch
      %54 = sbr.rel (0) target = $region13
    $region12: #{tpu_custom_call.1} parent=1 // pred_region
      %s56 = ssub.s32 256, 256
      %57 = vsyncadd [#allocation4], %s56
      %s58 = sshll.u32 [#allocation5], 4
      %s59 = int_to_ptr.vmem [resolvable:$true] %s58
      %64 = dma.vmem_to_hbm [thread:$0]  %s59, 256, %s1, [#allocation4], 128, 128, 8
    $region13: #{tpu_custom_call.1} parent=1 // pred_fallthru
      _
    // Predicated region
    $region14: #{tpu_custom_call.1} parent=1 // pred_check
      _
    $region15: #{tpu_custom_call.1} parent=1 // pred_check_branch
      %66 = sbr.rel (0) target = $region17
    $region16: #{tpu_custom_call.1} parent=1 // pred_region
      %67 = dma.done [#allocation4], 256
    $region17: #{tpu_custom_call.1} parent=1 // pred_fallthru
      _
    %68 = vsyncpa [#allocation3], 1
    %69 = vsyncpa [#allocation4], 1

</llo_original>
